<compile_context>
chip_gen: v6e
topology: v6e:2x2x1
jax: 0.10.0
libtpu: 0.0.40
codegen_flags: <defaults>
</compile_context>

<pallas_src>
import functools

import jax
import jax.numpy as jnp
from jax.experimental import pallas as pl
from jax.experimental.pallas import tpu as pltpu


# ---------------------------------------------------------------------------
# Stage 1: fused QKV projection kernel.
#   One grid step handles a (tp, C) row-tile of x for one batch element and
#   writes q (tp,H), kT (H,tp) and v (tp,H) directly (three outputs).
# ---------------------------------------------------------------------------
def _qkv_proj_kernel(x_ref, wq_ref, wk_ref, wv_ref, q_ref, kt_ref, v_ref):
    x = x_ref[...]                                            # (tp, C)
    q_ref[...] = jnp.dot(
        x, wq_ref[...], preferred_element_type=jnp.float32).astype(q_ref.dtype)
    v_ref[...] = jnp.dot(
        x, wv_ref[...], preferred_element_type=jnp.float32).astype(v_ref.dtype)
    # K^T computed directly: Wk (H, C) contracted with x (tp, C) over C -> (H, tp).
    # No in-kernel transpose, no lane slicing of a fused result.
    kt_ref[...] = jax.lax.dot_general(
        wk_ref[...], x,
        dimension_numbers=(((1,), (1,)), ((), ())),
        preferred_element_type=jnp.float32).astype(kt_ref.dtype)


# ---------------------------------------------------------------------------
# Stage 2: flash-style causal attention (online softmax over KV tiles).
# ---------------------------------------------------------------------------
def _flash_attn_kernel(q_ref, kt_ref, v_ref, o_ref, m_scr, l_scr, acc_scr,
                       *, tq, tk, approx_recip):
    qi = pl.program_id(1)
    ki = pl.program_id(2)

    @pl.when(ki == 0)
    def _init():
        m_scr[...] = jnp.full(m_scr.shape, -jnp.inf, jnp.float32)
        l_scr[...] = jnp.zeros(l_scr.shape, jnp.float32)
        acc_scr[...] = jnp.zeros(acc_scr.shape, jnp.float32)

    first_q = qi * tq
    last_q = qi * tq + tq - 1
    first_k = ki * tk
    last_k = ki * tk + tk - 1

    def _update(apply_mask):
        q = q_ref[...]          # (tq, H); already scaled by C**-0.5 via Wq
        kt = kt_ref[...]        # (H, tk); pre-transposed in stage 1
        v = v_ref[...]          # (tk, H)

        # (tq, H) @ (H, tk) -> (tq, tk); plain contraction, no relayout of K.
        s = jax.lax.dot_general(
            q, kt,
            dimension_numbers=(((1,), (0,)), ((), ())),
            preferred_element_type=jnp.float32,
        )

        if apply_mask:
            # Only diagonal-straddling blocks pay for the iota/compare/select.
            row = first_q + jax.lax.broadcasted_iota(jnp.int32, (tq, tk), 0)
            col = first_k + jax.lax.broadcasted_iota(jnp.int32, (tq, tk), 1)
            s = jnp.where(col <= row, s, -jnp.inf)

        m_prev = m_scr[...]
        m_new = jnp.maximum(m_prev, jnp.max(s, axis=-1, keepdims=True))
        alpha = jnp.exp(m_prev - m_new)
        p = jnp.exp(s - m_new)

        l_scr[...] = alpha * l_scr[...] + jnp.sum(p, axis=-1, keepdims=True)
        acc_scr[...] = alpha * acc_scr[...] + jnp.dot(
            p.astype(v.dtype), v, preferred_element_type=jnp.float32)
        m_scr[...] = m_new

    # Block classification (global indices):
    #   below_diag : every (row, col) satisfies col <= row  -> no mask needed
    #   straddle   : block intersects the diagonal          -> masked path
    #   (fully above the diagonal -> skipped entirely; its K/V DMA is also
    #    elided via the clamped index_map in the wrapper)
    below_diag = last_k <= first_q
    needed = first_k <= last_q          # ki == 0 is always needed -> m stays finite
    straddle = jnp.logical_and(needed, jnp.logical_not(below_diag))

    @pl.when(below_diag)
    def _no_mask():
        _update(apply_mask=False)

    @pl.when(straddle)
    def _masked():
        _update(apply_mask=True)

    @pl.when(ki == pl.num_programs(2) - 1)
    def _finalize():
        l = l_scr[...]
        if approx_recip:
            inv = pl.reciprocal(l, approx=True)   # EUP slot; bf16 path only
        else:
            inv = 1.0 / l                         # exact division for the f32 path
        o_ref[...] = (acc_scr[...] * inv).astype(o_ref.dtype)


# ---------------------------------------------------------------------------
# Tiling helpers.
# ---------------------------------------------------------------------------
def _round_up(n, m):
    return ((n + m - 1) // m) * m


def _largest_divisor(n, target, mult):
    """Largest t <= target with n % t == 0 and t % mult == 0 (fallback: n)."""
    t = min(target, n)
    t -= t % mult
    while t >= mult:
        if n % t == 0:
            return t
        t -= mult
    return n


def _seq_tiling(T, tq_target, tk_target, tp_target):
    """Returns (Tp, tq, tk, tp) with all tiles dividing the (padded) Tp."""
    if T <= 128:
        # Single tile along the sequence; full-extent blocks are always legal.
        return T, T, T, T
    Tp = _round_up(T, 128)                       # pad; tail is masked / sliced off
    tk = 128                                     # lane-dim tile of K^T: multiple of 128
    if tk_target >= 256 and Tp % 256 == 0:
        tk = min(256, tk_target - (tk_target % 128))
    tq = _largest_divisor(Tp, tq_target, 8)
    tp = _largest_divisor(Tp, tp_target, 8)
    return Tp, tq, tk, tp


# ---------------------------------------------------------------------------
# Wrapper
# ---------------------------------------------------------------------------
def head_forward(x, w_key, w_query, w_value, *, compute_dtype=jnp.bfloat16,
                 tq_target=256, tk_target=128, tp_target=1024):
    """Causal single-head attention.

    x: (B, T, C).  w_*: (head_size, C) -- PyTorch nn.Linear layout (no bias).
    compute_dtype: MXU-operand dtype (bf16 default; accumulation stays f32).
    """
    B, T, C = x.shape
    H = w_key.shape[0]
    scale = float(C) ** -0.5
    out_dtype = x.dtype
    cdt = jnp.dtype(compute_dtype) if compute_dtype is not None else x.dtype
    approx_recip = bool(cdt != jnp.dtype(jnp.float32))

    # Weights: fold the C**-0.5 softmax scale into the Q projection columns so
    # the attention kernel never scales the O(T^2) score matrix.
    wq_cols = (jnp.asarray(w_query).T * scale).astype(cdt)     # (C, H)
    wk_rows = jnp.asarray(w_key).astype(cdt)                   # (H, C) -> used for direct K^T
    wv_cols = jnp.asarray(w_value).T.astype(cdt)               # (C, H)

    # Sequence tiling (pad T up to a tile multiple instead of tq=tk=T cliffs).
    Tp, tq, tk, tp = _seq_tiling(T, tq_target, tk_target, tp_target)
    if Tp != T:
        x = jnp.pad(x, ((0, 0), (0, Tp - T), (0, 0)))
    x_in = x.astype(cdt)

    # ---- Stage 1: QKV projection; q, kT, v emitted as separate outputs -----
    q, kt, v = pl.pallas_call(
        _qkv_proj_kernel,
        out_shape=(
            jax.ShapeDtypeStruct((B, Tp, H), cdt),      # q
            jax.ShapeDtypeStruct((B, H, Tp), cdt),      # K^T (lane-dense along T)
            jax.ShapeDtypeStruct((B, Tp, H), cdt),      # v
        ),
        grid_spec=pltpu.PrefetchScalarGridSpec(
            num_scalar_prefetch=0,
            grid=(B, Tp // tp),
            in_specs=[
                pl.BlockSpec((None, tp, C), lambda b, i: (b, i, 0)),
                pl.BlockSpec((C, H), lambda b, i: (0, 0)),
                pl.BlockSpec((H, C), lambda b, i: (0, 0)),
                pl.BlockSpec((C, H), lambda b, i: (0, 0)),
            ],
            out_specs=(
                pl.BlockSpec((None, tp, H), lambda b, i: (b, i, 0)),
                pl.BlockSpec((None, H, tp), lambda b, i: (b, 0, i)),
                pl.BlockSpec((None, tp, H), lambda b, i: (b, i, 0)),
            ),
        ),
        compiler_params=pltpu.CompilerParams(
            dimension_semantics=("parallel", "parallel")),
    )(x_in, wq_cols, wk_rows, wv_cols)

    # ---- Stage 2: flash-style causal attention ------------------------------
    kv_steps = Tp // tk
    kernel = functools.partial(_flash_attn_kernel, tq=tq, tk=tk,
                               approx_recip=approx_recip)

    # Clamp K/V block indices to the last causally-needed KV block: once the
    # causal skip kicks in, the block index repeats and Pallas elides the DMA.
    def _last_needed(qi):
        return (qi * tq + tq - 1) // tk

    def _q_map(b, qi, ki):
        return (b, qi, 0)

    def _kt_map(b, qi, ki):
        return (b, 0, jnp.minimum(ki, _last_needed(qi)))

    def _v_map(b, qi, ki):
        return (b, jnp.minimum(ki, _last_needed(qi)), 0)

    def _o_map(b, qi, ki):
        return (b, qi, 0)

    if kv_steps >= 3:
        # Per-step K/V tiles are tiny; deeper buffering hides DMA issue latency.
        kt_spec = pl.BlockSpec((None, H, tk), _kt_map, pipeline_mode=pl.Buffered(3))
        v_spec = pl.BlockSpec((None, tk, H), _v_map, pipeline_mode=pl.Buffered(3))
    else:
        kt_spec = pl.BlockSpec((None, H, tk), _kt_map)
        v_spec = pl.BlockSpec((None, tk, H), _v_map)

    out_p = pl.pallas_call(
        kernel,
        out_shape=jax.ShapeDtypeStruct((B, Tp, H), out_dtype),
        grid_spec=pltpu.PrefetchScalarGridSpec(
            num_scalar_prefetch=0,
            grid=(B, Tp // tq, kv_steps),
            in_specs=[
                pl.BlockSpec((None, tq, H), _q_map),   # q
                kt_spec,                               # K^T
                v_spec,                                # v
            ],
            out_specs=pl.BlockSpec((None, tq, H), _o_map),
            scratch_shapes=[
                pltpu.VMEM((tq, 1), jnp.float32),      # running max  m
                pltpu.VMEM((tq, 1), jnp.float32),      # running sum  l
                pltpu.VMEM((tq, H), jnp.float32),      # accumulator
            ],
        ),
        compiler_params=pltpu.CompilerParams(
            dimension_semantics=("parallel", "parallel", "arbitrary")),
    )(q, kt, v)

    return out_p[:, :T, :] if Tp != T else out_p


# ---------------------------------------------------------------------------
# Pure-JAX reference (mirrors the PyTorch forward exactly).
# ---------------------------------------------------------------------------
def head_reference(x, w_key, w_query, w_value):
    B, T, C = x.shape
    k = x @ w_key.T
    q = x @ w_query.T
    v = x @ w_value.T
    wei = (q @ jnp.swapaxes(k, -2, -1)) * (C ** -0.5)
    tril = jnp.tril(jnp.ones((T, T), dtype=bool))
    wei = jnp.where(tril, wei, -jnp.inf)
    wei = jax.nn.softmax(wei, axis=-1)
    return wei @ v


if __name__ == "__main__":
    # Small shapes consistent with the module's forward.
    B, T, C, HEAD = 2, 8, 32, 16          # batch, context (seq), n_embeddings, head_size

    key = jax.random.PRNGKey(0)
    kx, kk, kq, kv = jax.random.split(key, 4)

    x = jax.random.normal(kx, (B, T, C), dtype=jnp.float32)
    bound = 1.0 / (C ** 0.5)
    w_key_p   = jax.random.uniform(kk, (HEAD, C), minval=-bound, maxval=bound, dtype=jnp.float32)
    w_query_p = jax.random.uniform(kq, (HEAD, C), minval=-bound, maxval=bound, dtype=jnp.float32)
    w_value_p = jax.random.uniform(kv, (HEAD, C), minval=-bound, maxval=bound, dtype=jnp.float32)

    ref = head_reference(x, w_key_p, w_query_p, w_value_p)

    # f32 path: tight check (exact finalize division on this path).
    out_f32 = head_forward(x, w_key_p, w_query_p, w_value_p, compute_dtype=jnp.float32)
    out_f32 = jax.block_until_ready(out_f32)
    assert out_f32.shape == (B, T, HEAD)
    assert jnp.allclose(out_f32, ref, atol=1e-3, rtol=1e-3), "f32 kernel mismatch vs reference"

    # Production default: bf16 MXU operands, f32 accumulation -> loose check.
    out_bf16 = head_forward(x, w_key_p, w_query_p, w_value_p)
    out_bf16 = jax.block_until_ready(out_bf16)
    assert out_bf16.shape == (B, T, HEAD)
    assert jnp.allclose(out_bf16, ref, atol=5e-2, rtol=5e-2), "bf16 kernel mismatch vs reference"

    print("KERNEL_OK")
</pallas_src>

<mosaic_0001>
module attributes {stable_mosaic.version = 11 : i64} {
  func.func @_qkv_proj_kernel(%arg0: i32, %arg1: i32, %arg2: memref<1x8x32xf32, #tpu.memory_space<vmem>>, %arg3: memref<32x16xf32, #tpu.memory_space<vmem>>, %arg4: memref<16x32xf32, #tpu.memory_space<vmem>>, %arg5: memref<32x16xf32, #tpu.memory_space<vmem>>, %arg6: memref<1x8x16xf32, #tpu.memory_space<vmem>>, %arg7: memref<1x16x8xf32, #tpu.memory_space<vmem>>, %arg8: memref<1x8x16xf32, #tpu.memory_space<vmem>>) attributes {dimension_semantics = [#tpu.dimension_semantics<parallel>, #tpu.dimension_semantics<parallel>], iteration_bounds = array<i64: 2, 1>, scalar_prefetch = 0 : i64, scratch_operands = 0 : i64, tpu.core_type = #tpu.core_type<tc>, window_params = [{transform_indices = @transform_0, window_bounds = array<i64: 1, 8, 32>}, {pipeline_mode = #tpu.pipeline_mode<synchronous>, transform_indices = @transform_1, window_bounds = array<i64: 32, 16>}, {pipeline_mode = #tpu.pipeline_mode<synchronous>, transform_indices = @transform_2, window_bounds = array<i64: 16, 32>}, {pipeline_mode = #tpu.pipeline_mode<synchronous>, transform_indices = @transform_3, window_bounds = array<i64: 32, 16>}, {transform_indices = @transform_4, window_bounds = array<i64: 1, 8, 16>}, {transform_indices = @transform_5, window_bounds = array<i64: 1, 16, 8>}, {transform_indices = @transform_6, window_bounds = array<i64: 1, 8, 16>}]} {
    %c0 = arith.constant 0 : index
    %c0_0 = arith.constant 0 : index
    %c0_1 = arith.constant 0 : index
    %0 = vector.load %arg2[%c0, %c0_0, %c0_1] : memref<1x8x32xf32, #tpu.memory_space<vmem>>, vector<1x8x32xf32>
    %1 = vector.shape_cast %0 : vector<1x8x32xf32> to vector<8x32xf32>
    %c0_2 = arith.constant 0 : index
    %c0_3 = arith.constant 0 : index
    %2 = vector.load %arg3[%c0_2, %c0_3] : memref<32x16xf32, #tpu.memory_space<vmem>>, vector<32x16xf32>
    %cst = arith.constant dense<0.000000e+00> : vector<8x16xf32>
    %3 = tpu.matmul %1, %2, %cst {dimension_numbers = #tpu.dot_dimension_numbers<[1], [0], [0], [1], [0, 0, 1, 1], [], []>} : vector<8x32xf32>, vector<32x16xf32>, vector<8x16xf32> -> vector<8x16xf32>
    %c0_4 = arith.constant 0 : index
    %c0_5 = arith.constant 0 : index
    %c0_6 = arith.constant 0 : index
    %4 = vector.load %arg6[%c0_4, %c0_5, %c0_6] : memref<1x8x16xf32, #tpu.memory_space<vmem>>, vector<1x8x16xf32>
    %5 = vector.shape_cast %4 : vector<1x8x16xf32> to vector<8x16xf32>
    %6 = vector.shape_cast %3 : vector<8x16xf32> to vector<1x8x16xf32>
    tpu.vector_store %arg6[%c0_4, %c0_5, %c0_6], %6 {strides = array<i32>} : memref<1x8x16xf32, #tpu.memory_space<vmem>>, vector<1x8x16xf32>,
    %c0_7 = arith.constant 0 : index
    %c0_8 = arith.constant 0 : index
    %7 = vector.load %arg5[%c0_7, %c0_8] : memref<32x16xf32, #tpu.memory_space<vmem>>, vector<32x16xf32>
    %cst_9 = arith.constant dense<0.000000e+00> : vector<8x16xf32>
    %8 = tpu.matmul %1, %7, %cst_9 {dimension_numbers = #tpu.dot_dimension_numbers<[1], [0], [0], [1], [0, 0, 1, 1], [], []>} : vector<8x32xf32>, vector<32x16xf32>, vector<8x16xf32> -> vector<8x16xf32>
    %c0_10 = arith.constant 0 : index
    %c0_11 = arith.constant 0 : index
    %c0_12 = arith.constant 0 : index
    %9 = vector.load %arg8[%c0_10, %c0_11, %c0_12] : memref<1x8x16xf32, #tpu.memory_space<vmem>>, vector<1x8x16xf32>
    %10 = vector.shape_cast %9 : vector<1x8x16xf32> to vector<8x16xf32>
    %11 = vector.shape_cast %8 : vector<8x16xf32> to vector<1x8x16xf32>
    tpu.vector_store %arg8[%c0_10, %c0_11, %c0_12], %11 {strides = array<i32>} : memref<1x8x16xf32, #tpu.memory_space<vmem>>, vector<1x8x16xf32>,
    %c0_13 = arith.constant 0 : index
    %c0_14 = arith.constant 0 : index
    %12 = vector.load %arg4[%c0_13, %c0_14] : memref<16x32xf32, #tpu.memory_space<vmem>>, vector<16x32xf32>
    %cst_15 = arith.constant dense<0.000000e+00> : vector<16x8xf32>
    %13 = tpu.matmul %12, %1, %cst_15 {dimension_numbers = #tpu.dot_dimension_numbers<[1], [1], [0], [0], [0, 0, 1, 0], [], []>} : vector<16x32xf32>, vector<8x32xf32>, vector<16x8xf32> -> vector<16x8xf32>
    %c0_16 = arith.constant 0 : index
    %c0_17 = arith.constant 0 : index
    %c0_18 = arith.constant 0 : index
    %14 = vector.load %arg7[%c0_16, %c0_17, %c0_18] : memref<1x16x8xf32, #tpu.memory_space<vmem>>, vector<1x16x8xf32>
    %15 = vector.shape_cast %14 : vector<1x16x8xf32> to vector<16x8xf32>
    %16 = vector.shape_cast %13 : vector<16x8xf32> to vector<1x16x8xf32>
    tpu.vector_store %arg7[%c0_16, %c0_17, %c0_18], %16 {strides = array<i32>} : memref<1x16x8xf32, #tpu.memory_space<vmem>>, vector<1x16x8xf32>,
    return
  }
  func.func @transform_0(%arg0: i32, %arg1: i32) -> (i32, i32, i32) {
    %c0_i32 = arith.constant 0 : i32
    %c0_i32_0 = arith.constant 0 : i32
    return %arg0, %arg1, %c0_i32 : i32, i32, i32
  }
  func.func @transform_1(%arg0: i32, %arg1: i32) -> (i32, i32) {
    %c0_i32 = arith.constant 0 : i32
    %c0_i32_0 = arith.constant 0 : i32
    %c0_i32_1 = arith.constant 0 : i32
    return %c0_i32, %c0_i32_0 : i32, i32
  }
  func.func @transform_2(%arg0: i32, %arg1: i32) -> (i32, i32) {
    %c0_i32 = arith.constant 0 : i32
    %c0_i32_0 = arith.constant 0 : i32
    %c0_i32_1 = arith.constant 0 : i32
    return %c0_i32, %c0_i32_0 : i32, i32
  }
  func.func @transform_3(%arg0: i32, %arg1: i32) -> (i32, i32) {
    %c0_i32 = arith.constant 0 : i32
    %c0_i32_0 = arith.constant 0 : i32
    %c0_i32_1 = arith.constant 0 : i32
    return %c0_i32, %c0_i32_0 : i32, i32
  }
  func.func @transform_4(%arg0: i32, %arg1: i32) -> (i32, i32, i32) {
    %c0_i32 = arith.constant 0 : i32
    %c0_i32_0 = arith.constant 0 : i32
    return %arg0, %arg1, %c0_i32 : i32, i32, i32
  }
  func.func @transform_5(%arg0: i32, %arg1: i32) -> (i32, i32, i32) {
    %c0_i32 = arith.constant 0 : i32
    %c0_i32_0 = arith.constant 0 : i32
    return %arg0, %c0_i32, %arg1 : i32, i32, i32
  }
  func.func @transform_6(%arg0: i32, %arg1: i32) -> (i32, i32, i32) {
    %c0_i32 = arith.constant 0 : i32
    %c0_i32_0 = arith.constant 0 : i32
    return %arg0, %arg1, %c0_i32 : i32, i32, i32
  }
}

</mosaic_0001>

<llo_original>
// kernel: tpu_custom_call.1
$region0: #{tpu_custom_call.1}
  #allocation0 [shape = 'u32[]', space=smem, size = 0x4, offset = 0x4, fixed_abs, tag = 'smem constant byte address 0x4 - core index']
  #allocation1 [shape = 'u32[144,128]{1,0:T(1,128)}', space=vmem, size = 0x12000, scoped, tag = 'internal scratch']
  %s0 = inlined_call_operand.vmem [shape: f32[2,8,32], index: 0, kind: input, shape index: {}]
  %s1 = inlined_call_operand.vmem [shape: f32[32,16], index: 1, kind: input, shape index: {}]
  %s2 = inlined_call_operand.vmem [shape: f32[16,32], index: 2, kind: input, shape index: {}]
  %s3 = inlined_call_operand.vmem [shape: f32[32,16], index: 3, kind: input, shape index: {}]
  %s4 = inlined_call_operand.hbm [shape: f32[2,8,16], index: 4, kind: output, shape index: {0}]
  %s5 = inlined_call_operand.vmem [shape: f32[2,16,8], index: 5, kind: output, shape index: {1}]
  %s6 = inlined_call_operand.hbm [shape: f32[2,8,16], index: 6, kind: output, shape index: {2}]
  %7 = xla_tuple %s4, %s5, %s6
  %s8 = sld [smem:[#allocation0]]
  $region65: #{tpu_custom_call.1} parent=0
    _
  %s10 = ssub.s32 1, %s8
  %s11 = scalar_select 0, %s10, %s8
  $region1: #{tpu_custom_call.1} parent=0
    #allocation2 [shape = 'u8[8192]{0}', space=vmem, size = 0x2000, scoped, tag = 'output window, operand 0']
    #allocation3 [shape = 's32[2]{0}', space=sflag, size = 0x8, scoped, tag = 'scoped memory for tpu_custom_call.1']
    #allocation4 [shape = 'u8[8192]{0}', space=vmem, size = 0x2000, scoped, tag = 'output window, operand 2']
    #allocation5 [shape = 's32[2]{0}', space=sflag, size = 0x8, scoped, tag = 'scoped memory for tpu_custom_call.1']
    %12 = vsyncpa [#allocation3], 0
    %s13 = scalar_lea.sflag [#allocation3], 1
    %14 = vsyncpa %s13, 0
    %15 = vsyncpa [#allocation5], 0
    %s16 = scalar_lea.sflag [#allocation5], 1
    %17 = vsyncpa %s16, 0
    loop: start=0, step=1, limit=4
    $region2: #{tpu_custom_call.1} parent=1 // loop_pre_header
      _
    $region3: #{tpu_custom_call.1} parent=1 // loop_header
      %s19 = sphi 0, %s23
      %p20 = scmp.ge.s32.totalorder %s19, 4
      %s26 = sphi 0, %s38
      %s27 = sphi 0, %s34
      %s28 = sphi 0, %s26
      %s29 = sphi 0, %s27
      %s30 = sphi 0, %s28
      %s31 = sphi 0, %s29
      %s43 = sphi 0, %s45
      %s46 = sphi 0, %s43
      %s47 = sphi 0, %s46
      %s63 = sphi 0, %s47
      %s67 = sphi 0, %s67
      %s69 = sphi 0, %s67
      %s70 = sphi 0, %s69
      %s84 = sphi 0, %s70
      %s88 = sphi 0, %s88
      %s90 = sphi 0, %s88
      %s91 = sphi 0, %s90
      %s105 = sphi 0, %s91
      %s109 = sphi 0, %s109
      %s111 = sphi 0, %s109
      %s112 = sphi 0, %s111
      %s126 = sphi 0, %s112
      %s134 = sphi 0, %s136
      %s137 = sphi 0, %s134
      %s138 = sphi 0, %s137
      %s154 = sphi 0, %s138
      %s162 = sphi 0, %s164
      %s165 = sphi 0, %s162
      %s166 = sphi 0, %s165
      %s182 = sphi 0, %s166
      %s190 = sphi 0, %s192
      %s193 = sphi 0, %s190
      %s194 = sphi 0, %s193
      %s210 = sphi 0, %s194
    $region4: #{tpu_custom_call.1} parent=1 // loop_header_branch
      %22 = sbr.rel (%p20) target = $region8
    $region5: #{tpu_custom_call.1} parent=1 // loop_body
      %s24 = ssub.s32 %s19, 1
      %s25 = ssub.s32 %s19, 2
      %s32 = sadd.s32 1, %s27
      %p33 = scmp.ge.s32.totalorder %s32, 1
      %s34 = scalar_select %p33, 0, %s32
      %s35 = sadd.s32 1, %s26
      %s36 = scalar_select %p33, %s35, %s26
      %p37 = scmp.ge.s32.totalorder %s36, 2
      %s38 = scalar_select %p37, 0, %s36
      %s39 = ssub.s32 %s26, %s38
      %s40 = ssub.s32 %s27, %s34
      %s41 = sor.u32 %s39, %s40
      %p42 = scmp.eq.s32.totalorder %s41, 0
      %s44 = sadd.s32 %s43, 1
      %s45 = scalar_select %p42, %s43, %s44
      %p48 = pneg %p42
      %p49 = scmp.eq.s32.totalorder %s19, 1
      %p50 = por %p48, %p49
      %p51 = scmp.ne.s32.totalorder %s43, %s46
      %p52 = scmp.eq.s32.totalorder %s19, 0
      %p53 = por %p51, %p52
      %p54 = scmp.ne.s32.totalorder %s43, %s46
      %p55 = scmp.eq.s32.totalorder %s24, 1
      %p56 = por %p54, %p55
      %p57 = scmp.ne.s32.totalorder %s46, %s47
      %p58 = scmp.eq.s32.totalorder %s24, 0
      %p59 = por %p57, %p58
      %p60 = scmp.ne.s32.totalorder %s46, %s47
      %p61 = scmp.eq.s32.totalorder %s25, 1
      %p62 = por %p60, %p61
      %p64 = scmp.ne.s32.totalorder %s47, %s63
      %p65 = scmp.eq.s32.totalorder %s25, 0
      %p66 = por %p64, %p65
      %s68 = sadd.s32 %s67, 1
      %p71 = scmp.eq.s32.totalorder %s19, 1
      %p72 = scmp.ne.s32.totalorder %s67, %s69
      %p73 = scmp.eq.s32.totalorder %s19, 0
      %p74 = por %p72, %p73
      %p75 = scmp.ne.s32.totalorder %s67, %s69
      %p76 = scmp.eq.s32.totalorder %s24, 1
      %p77 = por %p75, %p76
      %p78 = scmp.ne.s32.totalorder %s69, %s70
      %p79 = scmp.eq.s32.totalorder %s24, 0
      %p80 = por %p78, %p79
      %p81 = scmp.ne.s32.totalorder %s69, %s70
      %p82 = scmp.eq.s32.totalorder %s25, 1
      %p83 = por %p81, %p82
      %p85 = scmp.ne.s32.totalorder %s70, %s84
      %p86 = scmp.eq.s32.totalorder %s25, 0
      %p87 = por %p85, %p86
      %s89 = sadd.s32 %s88, 1
      %p92 = scmp.eq.s32.totalorder %s19, 1
      %p93 = scmp.ne.s32.totalorder %s88, %s90
      %p94 = scmp.eq.s32.totalorder %s19, 0
      %p95 = por %p93, %p94
      %p96 = scmp.ne.s32.totalorder %s88, %s90
      %p97 = scmp.eq.s32.totalorder %s24, 1
      %p98 = por %p96, %p97
      %p99 = scmp.ne.s32.totalorder %s90, %s91
      %p100 = scmp.eq.s32.totalorder %s24, 0
      %p101 = por %p99, %p100
      %p102 = scmp.ne.s32.totalorder %s90, %s91
      %p103 = scmp.eq.s32.totalorder %s25, 1
      %p104 = por %p102, %p103
      %p106 = scmp.ne.s32.totalorder %s91, %s105
      %p107 = scmp.eq.s32.totalorder %s25, 0
      %p108 = por %p106, %p107
      %s110 = sadd.s32 %s109, 1
      %p113 = scmp.eq.s32.totalorder %s19, 1
      %p114 = scmp.ne.s32.totalorder %s109, %s111
      %p115 = scmp.eq.s32.totalorder %s19, 0
      %p116 = por %p114, %p115
      %p117 = scmp.ne.s32.totalorder %s109, %s111
      %p118 = scmp.eq.s32.totalorder %s24, 1
      %p119 = por %p117, %p118
      %p120 = scmp.ne.s32.totalorder %s111, %s112
      %p121 = scmp.eq.s32.totalorder %s24, 0
      %p122 = por %p120, %p121
      %p123 = scmp.ne.s32.totalorder %s111, %s112
      %p124 = scmp.eq.s32.totalorder %s25, 1
      %p125 = por %p123, %p124
      %p127 = scmp.ne.s32.totalorder %s112, %s126
      %p128 = scmp.eq.s32.totalorder %s25, 0
      %p129 = por %p127, %p128
      %s130 = ssub.s32 %s26, %s38
      %s131 = ssub.s32 %s27, %s34
      %s132 = sor.u32 %s130, %s131
      %p133 = scmp.eq.s32.totalorder %s132, 0
      %s135 = sadd.s32 %s134, 1
      %s136 = scalar_select %p133, %s134, %s135
      %p139 = pneg %p133
      %p140 = scmp.eq.s32.totalorder %s19, 1
      %p141 = por %p139, %p140
      %p142 = scmp.ne.s32.totalorder %s134, %s137
      %p143 = scmp.eq.s32.totalorder %s19, 0
      %p144 = por %p142, %p143
      %p145 = scmp.ne.s32.totalorder %s134, %s137
      %p146 = scmp.eq.s32.totalorder %s24, 1
      %p147 = por %p145, %p146
      %p148 = scmp.ne.s32.totalorder %s137, %s138
      %p149 = scmp.eq.s32.totalorder %s24, 0
      %p150 = por %p148, %p149
      %p151 = scmp.ne.s32.totalorder %s137, %s138
      %p152 = scmp.eq.s32.totalorder %s25, 1
      %p153 = por %p151, %p152
      %p155 = scmp.ne.s32.totalorder %s138, %s154
      %p156 = scmp.eq.s32.totalorder %s25, 0
      %p157 = por %p155, %p156
      %s158 = ssub.s32 %s26, %s38
      %s159 = ssub.s32 %s27, %s34
      %s160 = sor.u32 %s158, %s159
      %p161 = scmp.eq.s32.totalorder %s160, 0
      %s163 = sadd.s32 %s162, 1
      %s164 = scalar_select %p161, %s162, %s163
      %p167 = pneg %p161
      %p168 = scmp.eq.s32.totalorder %s19, 1
      %p169 = por %p167, %p168
      %p170 = scmp.ne.s32.totalorder %s162, %s165
      %p171 = scmp.eq.s32.totalorder %s19, 0
      %p172 = por %p170, %p171
      %p173 = scmp.ne.s32.totalorder %s162, %s165
      %p174 = scmp.eq.s32.totalorder %s24, 1
      %p175 = por %p173, %p174
      %p176 = scmp.ne.s32.totalorder %s165, %s166
      %p177 = scmp.eq.s32.totalorder %s24, 0
      %p178 = por %p176, %p177
      %p179 = scmp.ne.s32.totalorder %s165, %s166
      %p180 = scmp.eq.s32.totalorder %s25, 1
      %p181 = por %p179, %p180
      %p183 = scmp.ne.s32.totalorder %s166, %s182
      %p184 = scmp.eq.s32.totalorder %s25, 0
      %p185 = por %p183, %p184
      %s186 = ssub.s32 %s26, %s38
      %s187 = ssub.s32 %s27, %s34
      %s188 = sor.u32 %s186, %s187
      %p189 = scmp.eq.s32.totalorder %s188, 0
      %s191 = sadd.s32 %s190, 1
      %s192 = scalar_select %p189, %s190, %s191
      %p195 = pneg %p189
      %p196 = scmp.eq.s32.totalorder %s19, 1
      %p197 = por %p195, %p196
      %p198 = scmp.ne.s32.totalorder %s190, %s193
      %p199 = scmp.eq.s32.totalorder %s19, 0
      %p200 = por %p198, %p199
      %p201 = scmp.ne.s32.totalorder %s190, %s193
      %p202 = scmp.eq.s32.totalorder %s24, 1
      %p203 = por %p201, %p202
      %p204 = scmp.ne.s32.totalorder %s193, %s194
      %p205 = scmp.eq.s32.totalorder %s24, 0
      %p206 = por %p204, %p205
      %p207 = scmp.ne.s32.totalorder %s193, %s194
      %p208 = scmp.eq.s32.totalorder %s25, 1
      %p209 = por %p207, %p208
      %p211 = scmp.ne.s32.totalorder %s194, %s210
      %p212 = scmp.eq.s32.totalorder %s25, 0
      %p213 = por %p211, %p212
      %p214 = scmp.le.s32.totalorder 1, %s19
      %p215 = scmp.lt.s32.totalorder %s19, 3
      %p216 = pnand %p214, %p215
      %p217 = pneg %p216
      // Predicated region
      $region9: #{tpu_custom_call.1} parent=5 // pred_check
        _
      $region10: #{tpu_custom_call.1} parent=5 // pred_check_branch
        %219 = sbr.rel (%p216) target = $region12
      $region11: #{tpu_custom_call.1} parent=5 // pred_region
        %s220 = ssub.s32 %s19, 1
        // Predicated region
        $region13: #{tpu_custom_call.1} parent=11 // pred_check
          %p221 = pneg %p80
        $region14: #{tpu_custom_call.1} parent=11 // pred_check_branch
          %223 = sbr.rel (%p221) target = $region16
        $region15: #{tpu_custom_call.1} parent=11 // pred_region
          _
        $region16: #{tpu_custom_call.1} parent=11 // pred_fallthru
          _
        // Predicated region
        $region17: #{tpu_custom_call.1} parent=11 // pred_check
          %p224 = pneg %p101
        $region18: #{tpu_custom_call.1} parent=11 // pred_check_branch
          %226 = sbr.rel (%p224) target = $region20
        $region19: #{tpu_custom_call.1} parent=11 // pred_region
          _
        $region20: #{tpu_custom_call.1} parent=11 // pred_fallthru
          _
        // Predicated region
        $region21: #{tpu_custom_call.1} parent=11 // pred_check
          %p227 = pneg %p122
        $region22: #{tpu_custom_call.1} parent=11 // pred_check_branch
          %229 = sbr.rel (%p227) target = $region24
        $region23: #{tpu_custom_call.1} parent=11 // pred_region
          _
        $region24: #{tpu_custom_call.1} parent=11 // pred_fallthru
          _
      $region12: #{tpu_custom_call.1} parent=5 // pred_fallthru
        _
      %p230 = scmp.lt.s32.totalorder %s19, 2
      // Predicated region
      $region25: #{tpu_custom_call.1} parent=5 // pred_check
        %p231 = pneg %p230
      $region26: #{tpu_custom_call.1} parent=5 // pred_check_branch
        %233 = sbr.rel (%p231) target = $region28
      $region27: #{tpu_custom_call.1} parent=5 // pred_region
        // Predicated region
        $region29: #{tpu_custom_call.1} parent=27 // pred_check
          %p234 = pneg %p53
        $region30: #{tpu_custom_call.1} parent=27 // pred_check_branch
          %236 = sbr.rel (%p234) target = $region32
        $region31: #{tpu_custom_call.1} parent=27 // pred_region
          %p237 = scmp.lt.s32.totalorder %s26, 1
          %s238 = scalar_select %p237, %s26, 1
          %p239 = scmp.lt.s32.totalorder %s27, 0
          %s240 = scalar_select %p239, %s27, 0
          %s241 = sadd.s32 %s240, %s238
          %s242 = smul.addr %s241, 8
          %s243 = scalar_lea.vmem %s0, %s242
        $region32: #{tpu_custom_call.1} parent=27 // pred_fallthru
          _
      $region28: #{tpu_custom_call.1} parent=5 // pred_fallthru
        _
      %p244 = scmp.le.s32.totalorder 1, %s19
      %p245 = scmp.lt.s32.totalorder %s19, 3
      %p246 = pnand %p244, %p245
      %p247 = pneg %p246
      // Predicated region
      $region33: #{tpu_custom_call.1} parent=5 // pred_check
        _
      $region34: #{tpu_custom_call.1} parent=5 // pred_check_branch
        %249 = sbr.rel (%p246) target = $region36
      $region35: #{tpu_custom_call.1} parent=5 // pred_region
        %s250 = ssub.s32 %s19, 1
        %p251 = scmp.lt.s32.totalorder %s28, 1
        %s252 = scalar_select %p251, %s28, 1
        %p253 = scmp.lt.s32.totalorder %s29, 0
        %s254 = scalar_select %p253, %s29, 0
        %s255 = sadd.s32 %s254, %s252
        %s256 = smul.addr %s255, 8
        %s257 = scalar_lea.vmem %s0, %s256
        %p258 = pneg %p59
        %p259 = pneg %p56
        %p260 = pneg %p80
        %p261 = pneg %p77
        %p262 = pneg %p101
        %p263 = pneg %p98
        %p264 = pneg %p122
        %p265 = pneg %p119
        %p266 = pneg %p150
        %p267 = pneg %p147
        %s268 = sand.u32 %s137, 1
        %s269 = scalar_lea.sflag [#allocation3], %s268
        %s270 = sand.u32 %s137, 1
        %s271 = smul.addr %s270, 8
        %s272 = scalar_lea.vmem [#allocation2], %s271
        %p273 = pneg %p178
        %p274 = pneg %p175
        %p275 = scmp.lt.s32.totalorder %s28, 1
        %s276 = scalar_select %p275, %s28, 1
        %p277 = scmp.lt.s32.totalorder %s29, 0
        %s278 = scalar_select %p277, %s29, 0
        %s279 = smul.addr %s276, 2
        %s280 = sadd.s32 %s278, %s279
        %s281 = smul.addr %s280, 8
        %s282 = scalar_lea.vmem %s5, %s281
        %p283 = pneg %p206
        %p284 = pneg %p203
        %s285 = sand.u32 %s193, 1
        %s286 = scalar_lea.sflag [#allocation5], %s285
        %s287 = sand.u32 %s193, 1
        %s288 = smul.addr %s287, 8
        %s289 = scalar_lea.vmem [#allocation4], %s288
        %p290 = scmp.lt.s32.totalorder %s28, 1
        %s291 = scalar_select %p290, %s28, 1
        %p292 = scmp.lt.s32.totalorder %s29, 0
        %s293 = scalar_select %p292, %s29, 0
        %s294 = sadd.s32 %s293, %s291
        %s295 = smul.addr %s294, 8
        %s296 = scalar_lea.vmem %s0, %s295
        %p297 = scmp.lt.s32.totalorder %s28, 1
        %s298 = scalar_select %p297, %s28, 1
        %p299 = scmp.lt.s32.totalorder %s29, 0
        %s300 = scalar_select %p299, %s29, 0
        %s301 = smul.addr %s298, 2
        %s302 = sadd.s32 %s300, %s301
        %s303 = smul.addr %s302, 8
        %s304 = scalar_lea.vmem %s5, %s303
        %v305 = vld [vmem:[%s296] sm:$0xff]
        %v306 = vld [vmem:[%s1] sm:$0xff]
        %v307 = vld [vmem:[%s1 + $0x8] sm:$0xff]
        %v308 = vld [vmem:[%s1 + $0x10] sm:$0xff]
        %v309 = vld [vmem:[%s1 + $0x18] sm:$0xff]
        %vm310 = vcmask 261120
        %v312 = vsel %vm310, %v305, 0
        %314 = vmatprep.subr.mxu0 0.0
        %315 = vmatpush1.msra.mxu0 0.0
        %316 = vmatprep.subr.mxu0 0.0
        %317 = vmatpush1.msra.mxu0 0.0
        %318 = vmatprep.subr.mxu0 0.0
        %319 = vmatpush1.msra.mxu0 0.0
        %320 = vmatprep.subr.mxu0 0.0
        %321 = vmatpush1.msra.mxu0 0.0
        %322 = vmatprep.subr.mxu0 0.0
        %323 = vmatpush1.msra.mxu0 0.0
        %324 = vmatprep.subr.mxu0 0.0
        %325 = vmatpush1.msra.mxu0 0.0
        %326 = vmatprep.subr.mxu0 0.0
        %327 = vmatpush1.msra.mxu0 0.0
        %328 = vmatprep.subr.mxu0 0.0
        %329 = vmatpush1.msra.mxu0 0.0
        %330 = vmatprep.subr.mxu0 0.0
        %331 = vmatpush1.msra.mxu0 0.0
        %332 = vmatprep.subr.mxu0 0.0
        %333 = vmatpush1.msra.mxu0 0.0
        %334 = vmatprep.subr.mxu0 0.0
        %335 = vmatpush1.msra.mxu0 0.0
        %336 = vmatprep.subr.mxu0 0.0
        %337 = vmatpush1.msra.mxu0 0.0
        %338 = vmatprep.subr.mxu0 0.0
        %339 = vmatpush1.msra.mxu0 %v309
        %340 = vmatprep.subr.mxu0 0.0
        %341 = vmatpush1.msra.mxu0 %v308
        %342 = vmatprep.subr.mxu0 0.0
        %343 = vmatpush1.msra.mxu0 %v307
        %344 = vmatprep.subr.mxu0 0.0
        %345 = vmatpush1.msra.mxu0 %v306
        %346 = vmatprep.subr.mxu0 0.0
        %347 = vmatpush2.msra.mxu0 0.0
        %348 = vmatprep.subr.mxu0 0.0
        %349 = vmatpush2.msra.mxu0 0.0
        %350 = vmatprep.subr.mxu0 0.0
        %351 = vmatpush2.msra.mxu0 0.0
        %352 = vmatprep.subr.mxu0 0.0
        %353 = vmatpush2.msra.mxu0 0.0
        %354 = vmatprep.subr.mxu0 0.0
        %355 = vmatpush2.msra.mxu0 0.0
        %356 = vmatprep.subr.mxu0 0.0
        %357 = vmatpush2.msra.mxu0 0.0
        %358 = vmatprep.subr.mxu0 0.0
        %359 = vmatpush2.msra.mxu0 0.0
        %360 = vmatprep.subr.mxu0 0.0
        %361 = vmatpush2.msra.mxu0 0.0
        %362 = vmatprep.subr.mxu0 0.0
        %363 = vmatpush2.msra.mxu0 0.0
        %364 = vmatprep.subr.mxu0 0.0
        %365 = vmatpush2.msra.mxu0 0.0
        %366 = vmatprep.subr.mxu0 0.0
        %367 = vmatpush2.msra.mxu0 0.0
        %368 = vmatprep.subr.mxu0 0.0
        %369 = vmatpush2.msra.mxu0 0.0
        %370 = vmatprep.subr.mxu0 0.0
        %371 = vmatpush2.msra.mxu0 0.0
        %372 = vmatprep.subr.mxu0 0.0
        %373 = vmatpush2.msra.mxu0 0.0
        %374 = vmatprep.subr.mxu0 0.0
        %375 = vmatpush2.msra.mxu0 0.0
        %376 = vmatprep.subr.mxu0 0.0
        %377 = vmatpush2.msra.mxu0 0.0
        %378 = vmatprep.mubr.f32.mxu0 0.0
        %379 = vmatmul.mubr.f32.gmra.mxu0 %v312
        %v380 = vpop.f32.mrf.mxu0
        %v381 = vadd.f32 0.0, %v380
        %v382 = vpop.f32.mrf.mxu0
        %383 = vdwg.mxu0
        %vm384 = vcmask 130048
        %385 = vst.msk [vmem:[%s272] sm:$0xff] %vm384, %v381
        %v386 = vld [vmem:[%s3] sm:$0xff]
        %v387 = vld [vmem:[%s3 + $0x8] sm:$0xff]
        %v388 = vld [vmem:[%s3 + $0x10] sm:$0xff]
        %v389 = vld [vmem:[%s3 + $0x18] sm:$0xff]
        %390 = vmatprep.subr.mxu0 0.0
        %391 = vmatpush1.msra.mxu0 0.0
        %392 = vmatprep.subr.mxu0 0.0
        %393 = vmatpush1.msra.mxu0 0.0
        %394 = vmatprep.subr.mxu0 0.0
        %395 = vmatpush1.msra.mxu0 0.0
        %396 = vmatprep.subr.mxu0 0.0
        %397 = vmatpush1.msra.mxu0 0.0
        %398 = vmatprep.subr.mxu0 0.0
        %399 = vmatpush1.msra.mxu0 0.0
        %400 = vmatprep.subr.mxu0 0.0
        %401 = vmatpush1.msra.mxu0 0.0
        %402 = vmatprep.subr.mxu0 0.0
        %403 = vmatpush1.msra.mxu0 0.0
        %404 = vmatprep.subr.mxu0 0.0
        %405 = vmatpush1.msra.mxu0 0.0
        %406 = vmatprep.subr.mxu0 0.0
        %407 = vmatpush1.msra.mxu0 0.0
        %408 = vmatprep.subr.mxu0 0.0
        %409 = vmatpush1.msra.mxu0 0.0
        %410 = vmatprep.subr.mxu0 0.0
        %411 = vmatpush1.msra.mxu0 0.0
        %412 = vmatprep.subr.mxu0 0.0
        %413 = vmatpush1.msra.mxu0 0.0
        %414 = vmatprep.subr.mxu0 0.0
        %415 = vmatpush1.msra.mxu0 %v389
        %416 = vmatprep.subr.mxu0 0.0
        %417 = vmatpush1.msra.mxu0 %v388
        %418 = vmatprep.subr.mxu0 0.0
        %419 = vmatpush1.msra.mxu0 %v387
        %420 = vmatprep.subr.mxu0 0.0
        %421 = vmatpush1.msra.mxu0 %v386
        %422 = vmatprep.subr.mxu0 0.0
        %423 = vmatpush2.msra.mxu0 0.0
        %424 = vmatprep.subr.mxu0 0.0
        %425 = vmatpush2.msra.mxu0 0.0
        %426 = vmatprep.subr.mxu0 0.0
        %427 = vmatpush2.msra.mxu0 0.0
        %428 = vmatprep.subr.mxu0 0.0
        %429 = vmatpush2.msra.mxu0 0.0
        %430 = vmatprep.subr.mxu0 0.0
        %431 = vmatpush2.msra.mxu0 0.0
        %432 = vmatprep.subr.mxu0 0.0
        %433 = vmatpush2.msra.mxu0 0.0
        %434 = vmatprep.subr.mxu0 0.0
        %435 = vmatpush2.msra.mxu0 0.0
        %436 = vmatprep.subr.mxu0 0.0
        %437 = vmatpush2.msra.mxu0 0.0
        %438 = vmatprep.subr.mxu0 0.0
        %439 = vmatpush2.msra.mxu0 0.0
        %440 = vmatprep.subr.mxu0 0.0
        %441 = vmatpush2.msra.mxu0 0.0
        %442 = vmatprep.subr.mxu0 0.0
        %443 = vmatpush2.msra.mxu0 0.0
        %444 = vmatprep.subr.mxu0 0.0
        %445 = vmatpush2.msra.mxu0 0.0
        %446 = vmatprep.subr.mxu0 0.0
        %447 = vmatpush2.msra.mxu0 0.0
        %448 = vmatprep.subr.mxu0 0.0
        %449 = vmatpush2.msra.mxu0 0.0
        %450 = vmatprep.subr.mxu0 0.0
        %451 = vmatpush2.msra.mxu0 0.0
        %452 = vmatprep.subr.mxu0 0.0
        %453 = vmatpush2.msra.mxu0 0.0
        %454 = vmatprep.mubr.f32.mxu0 0.0
        %455 = vmatmul.mubr.f32.gmra.mxu0 %v312
        %v456 = vpop.f32.mrf.mxu0
        %v457 = vadd.f32 0.0, %v456
        %v458 = vpop.f32.mrf.mxu0
        %459 = vdwg.mxu0
        %460 = vst.msk [vmem:[%s289] sm:$0xff] %vm384, %v457
        %v461 = vld [vmem:[%s2] sm:$0xff]
        %v462 = vld [vmem:[%s2 + $0x8] sm:$0xff]
        %v464 = vsel %vm310, %v461, 0
        %v467 = vsel %vm310, %v462, 0
        %469 = vmatprep.subr.mxu0 0.0
        %470 = vmatpush1.xpose.msra.mxu0 0.0
        %471 = vmatprep.subr.mxu0 0.0
        %472 = vmatpush1.xpose.msra.mxu0 0.0
        %473 = vmatprep.subr.mxu0 0.0
        %474 = vmatpush1.xpose.msra.mxu0 0.0
        %475 = vmatprep.subr.mxu0 0.0
        %476 = vmatpush1.xpose.msra.mxu0 0.0
        %477 = vmatprep.subr.mxu0 0.0
        %478 = vmatpush1.xpose.msra.mxu0 0.0
        %479 = vmatprep.subr.mxu0 0.0
        %480 = vmatpush1.xpose.msra.mxu0 0.0
        %481 = vmatprep.subr.mxu0 0.0
        %482 = vmatpush1.xpose.msra.mxu0 0.0
        %483 = vmatprep.subr.mxu0 0.0
        %484 = vmatpush1.xpose.msra.mxu0 0.0
        %485 = vmatprep.subr.mxu0 0.0
        %486 = vmatpush1.xpose.msra.mxu0 0.0
        %487 = vmatprep.subr.mxu0 0.0
        %488 = vmatpush1.xpose.msra.mxu0 0.0
        %489 = vmatprep.subr.mxu0 0.0
        %490 = vmatpush1.xpose.msra.mxu0 0.0
        %491 = vmatprep.subr.mxu0 0.0
        %492 = vmatpush1.xpose.msra.mxu0 0.0
        %493 = vmatprep.subr.mxu0 0.0
        %494 = vmatpush1.xpose.msra.mxu0 0.0
        %495 = vmatprep.subr.mxu0 0.0
        %496 = vmatpush1.xpose.msra.mxu0 0.0
        %497 = vmatprep.subr.mxu0 0.0
        %498 = vmatpush1.xpose.msra.mxu0 0.0
        %499 = vmatprep.subr.mxu0 0.0
        %500 = vmatpush1.xpose.msra.mxu0 %v312
        %501 = vmatprep.subr.mxu0 0.0
        %502 = vmatpush2.xpose.msra.mxu0 0.0
        %503 = vmatprep.subr.mxu0 0.0
        %504 = vmatpush2.xpose.msra.mxu0 0.0
        %505 = vmatprep.subr.mxu0 0.0
        %506 = vmatpush2.xpose.msra.mxu0 0.0
        %507 = vmatprep.subr.mxu0 0.0
        %508 = vmatpush2.xpose.msra.mxu0 0.0
        %509 = vmatprep.subr.mxu0 0.0
        %510 = vmatpush2.xpose.msra.mxu0 0.0
        %511 = vmatprep.subr.mxu0 0.0
        %512 = vmatpush2.xpose.msra.mxu0 0.0
        %513 = vmatprep.subr.mxu0 0.0
        %514 = vmatpush2.xpose.msra.mxu0 0.0
        %515 = vmatprep.subr.mxu0 0.0
        %516 = vmatpush2.xpose.msra.mxu0 0.0
        %517 = vmatprep.subr.mxu0 0.0
        %518 = vmatpush2.xpose.msra.mxu0 0.0
        %519 = vmatprep.subr.mxu0 0.0
        %520 = vmatpush2.xpose.msra.mxu0 0.0
        %521 = vmatprep.subr.mxu0 0.0
        %522 = vmatpush2.xpose.msra.mxu0 0.0
        %523 = vmatprep.subr.mxu0 0.0
        %524 = vmatpush2.xpose.msra.mxu0 0.0
        %525 = vmatprep.subr.mxu0 0.0
        %526 = vmatpush2.xpose.msra.mxu0 0.0
        %527 = vmatprep.subr.mxu0 0.0
        %528 = vmatpush2.xpose.msra.mxu0 0.0
        %529 = vmatprep.subr.mxu0 0.0
        %530 = vmatpush2.xpose.msra.mxu0 0.0
        %531 = vmatprep.subr.mxu0 0.0
        %532 = vmatpush2.xpose.msra.mxu0 0.0
        %533 = vmatprep.mubr.f32.mxu0 0.0
        %534 = vmatmul.mubr.f32.gmra.mxu0 %v464
        %v535 = vpop.f32.mrf.mxu0
        %v536 = vadd.f32 0.0, %v535
        %v537 = vpop.f32.mrf.mxu0
        %538 = vmatprep.mubr.f32.mxu0 0.0
        %539 = vmatmul.mubr.f32.gmra.mxu0 %v467
        %v540 = vpop.f32.mrf.mxu0
        %v541 = vadd.f32 0.0, %v540
        %v542 = vpop.f32.mrf.mxu0
        %543 = vdwg.mxu0
        %vm544 = vcmask 64512
        %545 = vst.msk [vmem:[%s304] sm:$0xff] %vm544, %v536
        %546 = vst.msk [vmem:[%s304 + $0x8] sm:$0xff] %vm544, %v541
        %s547 = sand.u32 %s137, 1
        %s548 = scalar_lea.sflag [#allocation3], %s547
        %s549 = sand.u32 %s137, 1
        %s550 = smul.addr %s549, 8
        %s551 = scalar_lea.vmem [#allocation2], %s550
        %p552 = scmp.lt.s32.totalorder %s28, 1
        %s553 = scalar_select %p552, %s28, 1
        %p554 = scmp.lt.s32.totalorder %s29, 0
        %s555 = scalar_select %p554, %s29, 0
        %s556 = smul.addr %s553, 2
        %s557 = sadd.s32 %s555, %s556
        %s558 = smul.addr %s557, 8
        %s559 = scalar_lea.vmem %s5, %s558
        %s560 = sand.u32 %s193, 1
        %s561 = scalar_lea.sflag [#allocation5], %s560
        %s562 = sand.u32 %s193, 1
        %s563 = smul.addr %s562, 8
        %s564 = scalar_lea.vmem [#allocation4], %s563
        // Predicated region
        $region37: #{tpu_custom_call.1} parent=35 // pred_check
          %p565 = pneg %p147
        $region38: #{tpu_custom_call.1} parent=35 // pred_check_branch
          %567 = sbr.rel (%p565) target = $region40
        $region39: #{tpu_custom_call.1} parent=35 // pred_region
          %s569 = ssub.s32 128, 128
          %570 = vsyncadd %s548, %s569
          %s571 = sadd.s32 %s29, %s28
          %s572 = smul.addr %s571, 128
          %s573 = scalar_lea.hbm %s4, %s572
          %s575 = sshll.u32 %s551, 4
          %s576 = int_to_ptr.vmem [resolvable:$true] %s575
          %578 = dma.vmem_to_hbm [thread:$0]  %s576, 128, %s573, %s548
        $region40: #{tpu_custom_call.1} parent=35 // pred_fallthru
          _
        // Predicated region
        $region41: #{tpu_custom_call.1} parent=35 // pred_check
          %p579 = pneg %p175
        $region42: #{tpu_custom_call.1} parent=35 // pred_check_branch
          %581 = sbr.rel (%p579) target = $region44
        $region43: #{tpu_custom_call.1} parent=35 // pred_region
          _
        $region44: #{tpu_custom_call.1} parent=35 // pred_fallthru
          _
        // Predicated region
        $region45: #{tpu_custom_call.1} parent=35 // pred_check
          %p582 = pneg %p203
        $region46: #{tpu_custom_call.1} parent=35 // pred_check_branch
          %584 = sbr.rel (%p582) target = $region48
        $region47: #{tpu_custom_call.1} parent=35 // pred_region
          %s586 = ssub.s32 128, 128
          %587 = vsyncadd %s561, %s586
          %s588 = sadd.s32 %s29, %s28
          %s589 = smul.addr %s588, 128
          %s590 = scalar_lea.hbm %s6, %s589
          %s592 = sshll.u32 %s564, 4
          %s593 = int_to_ptr.vmem [resolvable:$true] %s592
          %595 = dma.vmem_to_hbm [thread:$0]  %s593, 128, %s590, %s561
        $region48: #{tpu_custom_call.1} parent=35 // pred_fallthru
          _
      $region36: #{tpu_custom_call.1} parent=5 // pred_fallthru
        _
      %p596 = scmp.le.s32.totalorder 2, %s19
      // Predicated region
      $region49: #{tpu_custom_call.1} parent=5 // pred_check
        %p597 = pneg %p596
      $region50: #{tpu_custom_call.1} parent=5 // pred_check_branch
        %599 = sbr.rel (%p597) target = $region52
      $region51: #{tpu_custom_call.1} parent=5 // pred_region
        %s600 = ssub.s32 %s19, 2
        // Predicated region
        $region53: #{tpu_custom_call.1} parent=51 // pred_check
          %p601 = pneg %p153
        $region54: #{tpu_custom_call.1} parent=51 // pred_check_branch
          %603 = sbr.rel (%p601) target = $region56
        $region55: #{tpu_custom_call.1} parent=51 // pred_region
          %s604 = sand.u32 %s138, 1
          %s605 = scalar_lea.sflag [#allocation3], %s604
          %s606 = sand.u32 %s138, 1
          %s607 = smul.addr %s606, 8
          %s608 = scalar_lea.vmem [#allocation2], %s607
          %609 = dma.done %s605, 128
        $region56: #{tpu_custom_call.1} parent=51 // pred_fallthru
          _
        // Predicated region
        $region57: #{tpu_custom_call.1} parent=51 // pred_check
          %p610 = pneg %p181
        $region58: #{tpu_custom_call.1} parent=51 // pred_check_branch
          %612 = sbr.rel (%p610) target = $region60
        $region59: #{tpu_custom_call.1} parent=51 // pred_region
          %p613 = scmp.lt.s32.totalorder %s30, 1
          %s614 = scalar_select %p613, %s30, 1
          %p615 = scmp.lt.s32.totalorder %s31, 0
          %s616 = scalar_select %p615, %s31, 0
          %s617 = smul.addr %s614, 2
          %s618 = sadd.s32 %s616, %s617
          %s619 = smul.addr %s618, 8
          %s620 = scalar_lea.vmem %s5, %s619
        $region60: #{tpu_custom_call.1} parent=51 // pred_fallthru
          _
        // Predicated region
        $region61: #{tpu_custom_call.1} parent=51 // pred_check
          %p621 = pneg %p209
        $region62: #{tpu_custom_call.1} parent=51 // pred_check_branch
          %623 = sbr.rel (%p621) target = $region64
        $region63: #{tpu_custom_call.1} parent=51 // pred_region
          %s624 = sand.u32 %s194, 1
          %s625 = scalar_lea.sflag [#allocation5], %s624
          %s626 = sand.u32 %s194, 1
          %s627 = smul.addr %s626, 8
          %s628 = scalar_lea.vmem [#allocation4], %s627
          %629 = dma.done %s625, 128
        $region64: #{tpu_custom_call.1} parent=51 // pred_fallthru
          _
      $region52: #{tpu_custom_call.1} parent=5 // pred_fallthru
        _
    $region6: #{tpu_custom_call.1} parent=1 // loop_footer
      %s23 = sadd.s32 1, %s19
    $region7: #{tpu_custom_call.1} parent=1 // loop_footer_branch
      %18 = sbr.rel target = $region3
    $region8: #{tpu_custom_call.1} parent=1 // loop_exit
      _
    %630 = vsyncpa [#allocation3], 1
    %s631 = scalar_lea.sflag [#allocation3], 1
    %632 = vsyncpa %s631, 1
    %633 = vsyncpa [#allocation5], 1
    %s634 = scalar_lea.sflag [#allocation5], 1
    %635 = vsyncpa %s634, 1

</llo_original>
